<compile_context>
chip_gen: v5e
topology: v5e:2x2
jax: 0.10.0
libtpu: 0.0.40
codegen_flags: <defaults>
</compile_context>

<pallas_src>
import math
import numpy as np

import jax
import jax.numpy as jnp
from jax import lax
from jax.experimental import pallas as pl
from jax.experimental.pallas import tpu as pltpu

HIDDEN = 128
BN_SCALE = 1.0 / math.sqrt(1.0 + 1e-5)   # eval BatchNorm1d: gamma=1, beta=0, mean=0, var=1


def _round_up(v, m):
    return ((v + m - 1) // m) * m


# ----------------------------- row-tiled fused Linear -----------------------------
def _linear_kernel(x_ref, w_ref, b_ref, o_ref):
    x = x_ref[...].astype(jnp.bfloat16)
    w = w_ref[...].astype(jnp.bfloat16)
    o_ref[...] = jnp.dot(x, w, preferred_element_type=jnp.float32) + b_ref[...]


def linear_pallas(x, w, b, tile_rows):
    n, k = x.shape
    m = w.shape[1]
    grid = (n // tile_rows,)
    return pl.pallas_call(
        _linear_kernel,
        grid=grid,
        out_shape=jax.ShapeDtypeStruct((n, m), jnp.float32),
        in_specs=[pl.BlockSpec((tile_rows, k), lambda i: (i, 0)),
                  pl.BlockSpec((k, m), lambda i: (0, 0)),
                  pl.BlockSpec((1, m), lambda i: (0, 0))],
        out_specs=pl.BlockSpec((tile_rows, m), lambda i: (i, 0)),
        compiler_params=pltpu.CompilerParams(dimension_semantics=("parallel",)),
    )(x, w, b)


# -------------------- edge gate + gather/scatter (scalar prefetch) ------------------
def _edge_gate_kernel(src_ref, dst_ref, xw_ref, e_ref, wc_ref, bc_ref,
                      eo_ref, acc_ref, gd_ref, gs_ref, ms_ref):
    t = pl.program_id(0)
    te, h = e_ref.shape
    base = t * te

    @pl.when(t == 0)
    def _():
        acc_ref[...] = jnp.zeros_like(acc_ref)

    # ---- gather: D_i (from target i) and [B_j | E_j] (from source j), one row per edge
    def gather_body(kk, carry):
        i = dst_ref[base + kk]
        j = src_ref[base + kk]
        gd_ref[pl.ds(kk, 1), :] = xw_ref[pl.ds(i, 1), pl.ds(h, h)]          # D_i
        gs_ref[pl.ds(kk, 1), :] = xw_ref[pl.ds(j, 1), pl.ds(2 * h, 2 * h)]  # [B_j | E_j]
        return carry
    lax.fori_loop(0, te, gather_body, 0)

    # ---- vectorized over the whole edge tile
    ce = jnp.dot(e_ref[...].astype(jnp.bfloat16), wc_ref[...],
                 preferred_element_type=jnp.float32) + bc_ref[...]
    gs = gs_ref[...]
    e_ij = gd_ref[...] + gs[:, h:2 * h] + ce
    sig = jax.nn.sigmoid(e_ij)
    ms_ref[...] = jnp.concatenate([sig * gs[:, 0:h], sig], axis=-1)   # [msg | sigma]
    # edge output: residual + ReLU(eval-BN(e_ij))
    eo_ref[...] = e_ref[...] + jnp.maximum(e_ij * BN_SCALE, 0.0)

    # ---- scatter-add (sigma*B_j | sigma) into the resident node accumulator
    def scatter_body(kk, carry):
        i = dst_ref[base + kk]
        acc_ref[pl.ds(i, 1), :] = acc_ref[pl.ds(i, 1), :] + ms_ref[pl.ds(kk, 1), :]
        return carry
    lax.fori_loop(0, te, scatter_body, 0)


def edge_gate_scatter_pallas(src, dst, xw, e, wc, bc, tile_e, n_pad):
    e_pad, h = e.shape
    grid = (e_pad // tile_e,)
    grid_spec = pltpu.PrefetchScalarGridSpec(
        num_scalar_prefetch=2,
        grid=grid,
        in_specs=[pl.BlockSpec((n_pad, 4 * h), lambda t, s, d: (0, 0)),   # node table
                  pl.BlockSpec((tile_e, h), lambda t, s, d: (t, 0)),      # edge feats
                  pl.BlockSpec((h, h), lambda t, s, d: (0, 0)),           # C weight
                  pl.BlockSpec((1, h), lambda t, s, d: (0, 0))],          # C bias
        out_specs=(pl.BlockSpec((tile_e, h), lambda t, s, d: (t, 0)),     # e_out
                   pl.BlockSpec((n_pad, 2 * h), lambda t, s, d: (0, 0))), # [num | den]
        scratch_shapes=[pltpu.VMEM((tile_e, h), jnp.float32),
                        pltpu.VMEM((tile_e, 2 * h), jnp.float32),
                        pltpu.VMEM((tile_e, 2 * h), jnp.float32)])
    e_out, acc = pl.pallas_call(
        _edge_gate_kernel,
        grid_spec=grid_spec,
        out_shape=(jax.ShapeDtypeStruct((e_pad, h), jnp.float32),
                   jax.ShapeDtypeStruct((n_pad, 2 * h), jnp.float32)),
        compiler_params=pltpu.CompilerParams(dimension_semantics=("arbitrary",)),
    )(src, dst, xw, e, wc, bc)
    return e_out, acc


# ------------------------------- node update kernel --------------------------------
def _node_update_kernel(x_ref, ax_ref, acc_ref, o_ref):
    h = x_ref.shape[1]
    acc = acc_ref[...]
    num = acc[:, 0:h]
    den = acc[:, h:2 * h]
    aggr = num * pl.reciprocal(den + 1e-6, approx=True)
    o_ref[...] = x_ref[...] + jnp.maximum((ax_ref[...] + aggr) * BN_SCALE, 0.0)


def node_update_pallas(x, xw, acc, tile_n):
    n_pad, h = x.shape
    grid = (n_pad // tile_n,)
    return pl.pallas_call(
        _node_update_kernel,
        grid=grid,
        out_shape=jax.ShapeDtypeStruct((n_pad, h), jnp.float32),
        in_specs=[pl.BlockSpec((tile_n, h), lambda i: (i, 0)),
                  pl.BlockSpec((tile_n, h), lambda i: (i, 0)),      # A-columns of xw
                  pl.BlockSpec((tile_n, 2 * h), lambda i: (i, 0))],
        out_specs=pl.BlockSpec((tile_n, h), lambda i: (i, 0)),
        compiler_params=pltpu.CompilerParams(dimension_semantics=("parallel",)),
    )(x, xw, acc)


# -------------------------------------- glue ---------------------------------------
def gatedgcn_forward(params, x, edge_attr, edge_index,
                     tile_n_max=256, tile_e_max=256):
    """GatedGCN.forward: node/edge encoders followed by num_layers GatedGCN layers."""
    n = x.shape[0]
    ne = edge_attr.shape[0]

    tile_n = min(tile_n_max, _round_up(n + 1, 8))
    n_pad = _round_up(n + 1, tile_n)            # >= n+1 so row `n` is a dummy sink node
    tile_e = min(tile_e_max, _round_up(ne, 8))
    e_pad = _round_up(ne, tile_e)

    x_p = jnp.zeros((n_pad, x.shape[1]), jnp.float32).at[:n].set(x)
    ea_p = jnp.zeros((e_pad, edge_attr.shape[1]), jnp.float32).at[:ne].set(edge_attr)
    src = jnp.full((e_pad,), n, jnp.int32).at[:ne].set(edge_index[0].astype(jnp.int32))
    dst = jnp.full((e_pad,), n, jnp.int32).at[:ne].set(edge_index[1].astype(jnp.int32))

    hx = linear_pallas(x_p, params['node_w'], params['node_b'], tile_n)
    he = linear_pallas(ea_p, params['edge_w'], params['edge_b'], tile_e)

    for layer in params['layers']:
        xw = linear_pallas(hx, layer['wx'], layer['bx'], tile_n)       # [A | D | B | E]
        he_new, acc = edge_gate_scatter_pallas(src, dst, xw, he,
                                               layer['wc'], layer['bc'],
                                               tile_e, n_pad)
        hx = node_update_pallas(hx, xw, acc, tile_n)
        he = he_new

    return hx[:n], he[:ne]


# ------------------------------ deterministic params -------------------------------
def init_linear(key, in_dim, out_dim, scale=0.05, wdtype=jnp.bfloat16):
    kw, kb = jax.random.split(key)
    w = (scale * jax.random.normal(kw, (in_dim, out_dim), jnp.float32)).astype(wdtype)
    b = scale * jax.random.normal(kb, (1, out_dim), jnp.float32)
    return w, b


def init_gatedgcn(key, in_channels, edge_features, hidden, num_layers):
    keys = jax.random.split(key, 2 + num_layers)
    node_w, node_b = init_linear(keys[0], in_channels, hidden)
    edge_w, edge_b = init_linear(keys[1], edge_features, hidden)
    layers = []
    for l in range(num_layers):
        lk = jax.random.split(keys[2 + l], 5)
        wa, ba = init_linear(lk[0], hidden, hidden)
        wb, bb = init_linear(lk[1], hidden, hidden)
        wc, bc = init_linear(lk[2], hidden, hidden)
        wd, bd = init_linear(lk[3], hidden, hidden)
        we, be = init_linear(lk[4], hidden, hidden)
        layers.append(dict(
            wx=jnp.concatenate([wa, wd, wb, we], axis=1),   # column order: [A | D | B | E]
            bx=jnp.concatenate([ba, bd, bb, be], axis=1),
            wc=wc, bc=bc))
    return dict(node_w=node_w, node_b=node_b, edge_w=edge_w, edge_b=edge_b,
                layers=layers)


# ---------------------------------------- demo -------------------------------------
if __name__ == "__main__":
    key = jax.random.PRNGKey(0)
    kp, kx, ke = jax.random.split(key, 3)

    params = init_gatedgcn(kp, in_channels=41, edge_features=10,
                           hidden=HIDDEN, num_layers=4)

    # small bidirectional ring graph
    n_nodes = 30
    idx = np.arange(n_nodes)
    src_np = np.concatenate([idx, (idx + 1) % n_nodes])
    dst_np = np.concatenate([(idx + 1) % n_nodes, idx])
    edge_index = jnp.asarray(np.stack([src_np, dst_np]).astype(np.int32))   # [2, 60]

    x = jax.random.normal(kx, (n_nodes, 41), jnp.float32)
    edge_attr = jax.random.normal(ke, (edge_index.shape[1], 10), jnp.float32)

    hx, he = gatedgcn_forward(params, x, edge_attr, edge_index)
    hx, he = jax.block_until_ready((hx, he))

    assert hx.shape == (n_nodes, HIDDEN)
    assert he.shape == (edge_index.shape[1], HIDDEN)
    assert bool(jnp.isfinite(hx).all()) and bool(jnp.isfinite(he).all())
    print("KERNEL_OK")
</pallas_src>

<mosaic_0001>
module attributes {stable_mosaic.version = 11 : i64} {
  func.func @_linear_kernel(%arg0: i32, %arg1: memref<32x41xf32, #tpu.memory_space<vmem>>, %arg2: memref<41x128xbf16, #tpu.memory_space<vmem>>, %arg3: memref<1x128xf32, #tpu.memory_space<vmem>>, %arg4: memref<32x128xf32, #tpu.memory_space<vmem>>) attributes {dimension_semantics = [#tpu.dimension_semantics<parallel>], iteration_bounds = array<i64: 1>, scalar_prefetch = 0 : i64, scratch_operands = 0 : i64, tpu.core_type = #tpu.core_type<tc>, window_params = [{transform_indices = @transform_0, window_bounds = array<i64: 32, 41>}, {pipeline_mode = #tpu.pipeline_mode<synchronous>, transform_indices = @transform_1, window_bounds = array<i64: 41, 128>}, {pipeline_mode = #tpu.pipeline_mode<synchronous>, transform_indices = @transform_2, window_bounds = array<i64: 1, 128>}, {transform_indices = @transform_3, window_bounds = array<i64: 32, 128>}]} {
    %c0 = arith.constant 0 : index
    %c0_0 = arith.constant 0 : index
    %0 = vector.load %arg1[%c0, %c0_0] : memref<32x41xf32, #tpu.memory_space<vmem>>, vector<32x41xf32>
    %1 = arith.truncf %0 : vector<32x41xf32> to vector<32x41xbf16>
    %c0_1 = arith.constant 0 : index
    %c0_2 = arith.constant 0 : index
    %2 = vector.load %arg2[%c0_1, %c0_2] : memref<41x128xbf16, #tpu.memory_space<vmem>>, vector<41x128xbf16>
    %cst = arith.constant dense<0.000000e+00> : vector<32x128xf32>
    %3 = tpu.matmul %1, %2, %cst {dimension_numbers = #tpu.dot_dimension_numbers<[1], [0], [0], [1], [0, 0, 1, 1], [], []>} : vector<32x41xbf16>, vector<41x128xbf16>, vector<32x128xf32> -> vector<32x128xf32>
    %c0_3 = arith.constant 0 : index
    %c0_4 = arith.constant 0 : index
    %4 = vector.load %arg3[%c0_3, %c0_4] : memref<1x128xf32, #tpu.memory_space<vmem>>, vector<1x128xf32>
    %5 = vector.broadcast %4 : vector<1x128xf32> to vector<32x128xf32>
    %6 = arith.addf %3, %5 : vector<32x128xf32>
    %c0_5 = arith.constant 0 : index
    %c0_6 = arith.constant 0 : index
    %7 = vector.load %arg4[%c0_5, %c0_6] : memref<32x128xf32, #tpu.memory_space<vmem>>, vector<32x128xf32>
    tpu.vector_store %arg4[%c0_5, %c0_6], %6 {strides = array<i32>} : memref<32x128xf32, #tpu.memory_space<vmem>>, vector<32x128xf32>,
    return
  }
  func.func @transform_0(%arg0: i32) -> (i32, i32) {
    %c0_i32 = arith.constant 0 : i32
    %c0_i32_0 = arith.constant 0 : i32
    return %arg0, %c0_i32 : i32, i32
  }
  func.func @transform_1(%arg0: i32) -> (i32, i32) {
    %c0_i32 = arith.constant 0 : i32
    %c0_i32_0 = arith.constant 0 : i32
    %c0_i32_1 = arith.constant 0 : i32
    return %c0_i32, %c0_i32_0 : i32, i32
  }
  func.func @transform_2(%arg0: i32) -> (i32, i32) {
    %c0_i32 = arith.constant 0 : i32
    %c0_i32_0 = arith.constant 0 : i32
    %c0_i32_1 = arith.constant 0 : i32
    return %c0_i32, %c0_i32_0 : i32, i32
  }
  func.func @transform_3(%arg0: i32) -> (i32, i32) {
    %c0_i32 = arith.constant 0 : i32
    %c0_i32_0 = arith.constant 0 : i32
    return %arg0, %c0_i32 : i32, i32
  }
}

</mosaic_0001>

<llo_original>
// kernel: tpu_custom_call.1
$region0: #{tpu_custom_call.1}
  #allocation0 [shape = 'u32[]', space=smem, size = 0x4, offset = 0x4, fixed_abs, tag = 'smem constant byte address 0x4 - core index']
  #allocation1 [shape = 'u32[72,128]{1,0:T(1,128)}', space=vmem, size = 0x9000, scoped, tag = 'internal scratch']
  %s0 = inlined_call_operand.hbm [shape: f32[32,41], index: 0, kind: input, shape index: {}]
  %s1 = inlined_call_operand.hbm [shape: bf16[41,128], index: 1, kind: input, shape index: {}]
  %s2 = inlined_call_operand.vmem [shape: f32[1,128], index: 2, kind: input, shape index: {}]
  %s3 = inlined_call_operand.hbm [shape: f32[32,128], index: 3, kind: output, shape index: {}]
  %s4 = sld [smem:[#allocation0]]
  $region30: #{tpu_custom_call.1} parent=0
    _
  %s6 = ssub.s32 1, %s4
  %s7 = scalar_select 0, %s6, %s4
  $region1: #{tpu_custom_call.1} parent=0
    #allocation2 [shape = 'u8[16384]{0}', space=vmem, size = 0x4000, scoped, tag = 'input window, operand 0, single buffered']
    #allocation3 [shape = 's32[1]{0}', space=sflag, size = 0x4, scoped, tag = 'scoped memory for tpu_custom_call.1']
    #allocation4 [shape = 's32[1]{0}', space=sflag, size = 0x4, scoped, tag = 'scoped memory for tpu_custom_call.1']
    #allocation5 [shape = 'u8[12288]{0}', space=vmem, size = 0x3000, scoped, tag = 'input window, operand 1, single buffered']
    #allocation6 [shape = 's32[1]{0}', space=sflag, size = 0x4, scoped, tag = 'scoped memory for tpu_custom_call.1']
    #allocation7 [shape = 'u8[16384]{0}', space=vmem, size = 0x4000, scoped, tag = 'output window, operand 0, single buffered']
    %8 = vsyncpa [#allocation3], 0
    %9 = vsyncpa [#allocation6], 0
    %10 = vsyncpa [#allocation4], 0
    // Predicated region
    $region2: #{tpu_custom_call.1} parent=1 // pred_check
      _
    $region3: #{tpu_custom_call.1} parent=1 // pred_check_branch
      %12 = sbr.rel (0) target = $region5
    $region4: #{tpu_custom_call.1} parent=1 // pred_region
      %14 = vsyncadd [#allocation3], 0
      %s15 = sshll.u32 %s0, 4
      %s16 = int_to_ptr.hbm [resolvable:$true] %s15
      %s17 = sshll.u32 [#allocation2], 4
      %s18 = int_to_ptr.vmem [resolvable:$true] %s17
      %23 = dma.hbm_to_vmem [thread:$0]  %s16, 512, %s18, [#allocation3], 128, 128, 8
    $region5: #{tpu_custom_call.1} parent=1 // pred_fallthru
      _
    // Predicated region
    $region6: #{tpu_custom_call.1} parent=1 // pred_check
      _
    $region7: #{tpu_custom_call.1} parent=1 // pred_check_branch
      %25 = sbr.rel (0) target = $region9
    $region8: #{tpu_custom_call.1} parent=1 // pred_region
      %27 = vsyncadd [#allocation6], 0
      %s28 = sshll.u32 %s1, 4
      %s29 = int_to_ptr.hbm [resolvable:$true] %s28
      %s30 = sshll.u32 [#allocation5], 4
      %s31 = int_to_ptr.vmem [resolvable:$true] %s30
      %36 = dma.hbm_to_vmem [thread:$0]  %s29, 384, %s31, [#allocation6], 64, 64, 4
    $region9: #{tpu_custom_call.1} parent=1 // pred_fallthru
      _
    // Predicated region
    $region10: #{tpu_custom_call.1} parent=1 // pred_check
      _
    $region11: #{tpu_custom_call.1} parent=1 // pred_check_branch
      %38 = sbr.rel (0) target = $region13
    $region12: #{tpu_custom_call.1} parent=1 // pred_region
      _
    $region13: #{tpu_custom_call.1} parent=1 // pred_fallthru
      _
    // Predicated region
    $region14: #{tpu_custom_call.1} parent=1 // pred_check
      _
    $region15: #{tpu_custom_call.1} parent=1 // pred_check_branch
      %40 = sbr.rel (0) target = $region17
    $region16: #{tpu_custom_call.1} parent=1 // pred_region
      %42 = dma.done [#allocation3], 512
    $region17: #{tpu_custom_call.1} parent=1 // pred_fallthru
      _
    // Predicated region
    $region18: #{tpu_custom_call.1} parent=1 // pred_check
      _
    $region19: #{tpu_custom_call.1} parent=1 // pred_check_branch
      %44 = sbr.rel (0) target = $region21
    $region20: #{tpu_custom_call.1} parent=1 // pred_region
      %46 = dma.done [#allocation6], 384
    $region21: #{tpu_custom_call.1} parent=1 // pred_fallthru
      _
    %v48 = vld [vmem:[#allocation2] sm:$0xff]
    %v49 = vld [vmem:[#allocation2 + $0x8] sm:$0xff]
    %v50 = vld [vmem:[#allocation2 + $0x10] sm:$0xff]
    %v51 = vld [vmem:[#allocation2 + $0x18] sm:$0xff]
    %v52 = vpack.c.bf16 %v49, %v48
    %v53 = vpack.c.bf16 %v51, %v50
    %v54 = vld [vmem:[#allocation5] sm:$0xf]
    %v55 = vld [vmem:[#allocation5 + $0x4] sm:$0xf]
    %v56 = vld [vmem:[#allocation5 + $0x8] sm:$0xf]
    %v57 = vld [vmem:[#allocation5 + $0xc] sm:$0xf]
    %v58 = vld [vmem:[#allocation5 + $0x10] sm:$0xf]
    %v59 = vld [vmem:[#allocation5 + $0x14] sm:$0x1]
    %v60 = vld [vmem:[%s2] sm:$0x1]
    %v62 = vperm.slane %v60, 0
    %v70 = vunpack.c.l.b16 %v54
    %v71 = vunpack.c.l.b16 %v55
    %v72 = vunpack.c.l.b16 %v56
    %v73 = vunpack.c.l.b16 %v57
    %v74 = vunpack.c.l.b16 %v58
    %v75 = vunpack.c.l.b16 %v59
    %v76 = vpack.c.b16 %v71, %v70
    %v77 = vpack.c.b16 %v73, %v72
    %v78 = vpack.c.b16 %v75, %v74
    %vm81 = vcmask 334848
    %v83 = vsel %vm81, %v52, 0
    %v86 = vsel %vm81, %v53, 0
    %vm88 = vcmask 1043456
    %vm89 = vcmask 1044480
    %v90 = vsel %vm88, 4294967295, 65535
    %v91 = vsel %vm89, %v90, 0
    %v93 = vand.u32 %v78, %v91
    %95 = vmatpush.bf16.msra.mxu0 0
    %96 = vmatpush.bf16.msra.mxu0 0
    %97 = vmatpush.bf16.msra.mxu0 0
    %98 = vmatpush.bf16.msra.mxu0 0
    %99 = vmatpush.bf16.msra.mxu0 0
    %100 = vmatpush.bf16.msra.mxu0 %v93
    %101 = vmatpush.bf16.msra.mxu0 %v77
    %102 = vmatpush.bf16.msra.mxu0 %v76
    %103 = vmatmul.bf16.gmra.mxu0 %v83
    %v104 = vpop.f32.mrf.mxu0
    %v105 = vadd.f32 %v62, %v104
    %v106 = vpop.f32.mrf.mxu0
    %v107 = vadd.f32 %v62, %v106
    %108 = vmatmul.bf16.gmra.mxu0 %v86
    %v109 = vpop.f32.mrf.mxu0
    %v110 = vadd.f32 %v62, %v109
    %v111 = vpop.f32.mrf.mxu0
    %v112 = vadd.f32 %v62, %v111
    %113 = vdwg.mxu0
    %114 = vst [vmem:[#allocation7] sm:$0xff] %v105
    %115 = vst [vmem:[#allocation7 + $0x8] sm:$0xff] %v107
    %116 = vst [vmem:[#allocation7 + $0x10] sm:$0xff] %v110
    %117 = vst [vmem:[#allocation7 + $0x18] sm:$0xff] %v112
    // Predicated region
    $region22: #{tpu_custom_call.1} parent=1 // pred_check
      _
    $region23: #{tpu_custom_call.1} parent=1 // pred_check_branch
      %119 = sbr.rel (0) target = $region25
    $region24: #{tpu_custom_call.1} parent=1 // pred_region
      %121 = vsyncadd [#allocation4], 0
      %s122 = sshll.u32 [#allocation7], 4
      %s123 = int_to_ptr.vmem [resolvable:$true] %s122
      %s124 = sshll.u32 %s3, 4
      %s125 = int_to_ptr.hbm [resolvable:$true] %s124
      %130 = dma.vmem_to_hbm [thread:$0]  %s123, 512, %s125, [#allocation4], 128, 128, 8
    $region25: #{tpu_custom_call.1} parent=1 // pred_fallthru
      _
    // Predicated region
    $region26: #{tpu_custom_call.1} parent=1 // pred_check
      _
    $region27: #{tpu_custom_call.1} parent=1 // pred_check_branch
      %132 = sbr.rel (0) target = $region29
    $region28: #{tpu_custom_call.1} parent=1 // pred_region
      %134 = dma.done [#allocation4], 512
    $region29: #{tpu_custom_call.1} parent=1 // pred_fallthru
      _
    %135 = vsyncpa [#allocation3], 1
    %136 = vsyncpa [#allocation6], 1
    %137 = vsyncpa [#allocation4], 1

</llo_original>
